<compile_context>
chip_gen: v6e
topology: v6e:2x2x1
jax: 0.10.0
libtpu: 0.0.40
codegen_flags: <defaults>
</compile_context>

<pallas_src>
import numpy as np
import jax
import jax.numpy as jnp
from jax.experimental import pallas as pl
from jax.experimental.pallas import tpu as pltpu

# ---- synthetic small FLAME sizes ----
N_SHAPE = 8
N_EXP = 8
NB = N_SHAPE + N_EXP          # betas = [shape (zeros), expression]
V = 256                       # vertices
J = 5                         # joints: global, neck, jaw, eye_L, eye_R
PARENTS = (-1, 0, 1, 1, 1)    # FLAME kintree
POSE_DIM = 3 * J              # 15
POSE_FEAT = 9 * (J - 1)       # 36
NC = NB + POSE_FEAT           # 52 fused blendshape coefficients

_VMEM = pl.BlockSpec(memory_space=pltpu.MemorySpace.VMEM)


# ------------------------- fused Pallas kernel -------------------------
def _flame_kernel(coeffs_ref, a_ref, dirs_ref, vt_ref, wT_ref, verts_ref):
    """Fused blendshapes + linear blend skinning (SoA layout).

    coeffs: (B, 52)   = [betas | pose_feature]
    a:      (B*16, J) = per-batch relative transforms, flattened row-major (4x4),
                        transposed so the J axis is the contraction axis
    dirs:   (52, 3V)  = stacked [shapedirs; posedirs], SoA columns (k*V + v)
    vt:     (1, 3V)   = template vertices, SoA
    wT:     (J, V)    = lbs_weights^T
    out:    verts (B, 3, V)  (SoA; wrapper transposes to (B, V, 3))
    """
    # blendshapes: one fused matmul, lane-dense (B, 3V) result
    v_posed = vt_ref[...] + jnp.dot(coeffs_ref[...], dirs_ref[...],
                                    preferred_element_type=jnp.float32)   # (B, 3V)
    # per-vertex transforms, lane-dense rows: T_all[b*16 + 4i+k, v]
    T_all = jnp.dot(a_ref[...], wT_ref[...],
                    preferred_element_type=jnp.float32)                   # (B*16, V)

    B = verts_ref.shape[0]
    Vn = verts_ref.shape[2]
    for b in range(B):  # tiny static batch, unrolled
        T = T_all[b * 16:(b + 1) * 16]                                    # (16, V)
        x = v_posed[b:b + 1, 0:Vn]                                        # (1, V)
        y = v_posed[b:b + 1, Vn:2 * Vn]
        z = v_posed[b:b + 1, 2 * Vn:3 * Vn]
        # full-lane VPU FMAs; homogeneous rows T[12:16] are structurally [0,0,0,1]
        verts_ref[b, 0:1, :] = T[0:1] * x + T[1:2] * y + T[2:3] * z + T[3:4]
        verts_ref[b, 1:2, :] = T[4:5] * x + T[5:6] * y + T[6:7] * z + T[7:8]
        verts_ref[b, 2:3, :] = T[8:9] * x + T[9:10] * y + T[10:11] * z + T[11:12]


def flame_fused_pallas(coeffs, a2, dirs_soa, vt_soa, wT):
    B = coeffs.shape[0]
    # TODO(synk): at real FLAME sizes (V~5023, ~400 dirs) add a grid over 3V tiles
    # (and mark it "parallel" for v7x's 2 TensorCores) + vmem_limit_bytes headroom;
    # at V=256 everything (<300 KB) fits whole-array in VMEM on all generations.
    return pl.pallas_call(
        _flame_kernel,
        out_shape=jax.ShapeDtypeStruct((B, 3, V), jnp.float32),
        in_specs=[_VMEM] * 5,
        out_specs=_VMEM,
    )(coeffs, a2, dirs_soa, vt_soa, wT)


# ------------------------- plain-JAX glue -------------------------
def batch_rodrigues(rot_vecs):
    """rot_vecs: (N, 3) -> (N, 3, 3). Matches SMPL-X batch_rodrigues."""
    dtype = rot_vecs.dtype
    n = rot_vecs.shape[0]
    angle = jnp.linalg.norm(rot_vecs + 1e-8, axis=1, keepdims=True)   # (N, 1)
    rot_dir = rot_vecs / angle
    cos = jnp.cos(angle)[:, None, :]                                  # (N, 1, 1)
    sin = jnp.sin(angle)[:, None, :]
    rx, ry, rz = jnp.split(rot_dir, 3, axis=1)
    zeros = jnp.zeros((n, 1), dtype=dtype)
    K = jnp.concatenate(
        [zeros, -rz, ry, rz, zeros, -rx, -ry, rx, zeros], axis=1).reshape(n, 3, 3)
    ident = jnp.eye(3, dtype=dtype)[None]
    return ident + sin * K + (1.0 - cos) * jnp.matmul(K, K)


def batch_rigid_transform(rot_mats, joints):
    """rot_mats: (B, J, 3, 3), joints: (B, J, 3) -> (posed_joints, rel_transforms)."""
    B = rot_mats.shape[0]
    dtype = rot_mats.dtype
    joints = joints[..., None]                                        # (B, J, 3, 1)
    parents = list(PARENTS)
    rel_joints = joints.at[:, 1:].add(-joints[:, jnp.array(parents[1:])])
    rot_h = jnp.concatenate([rot_mats, jnp.zeros((B, J, 1, 3), dtype)], axis=2)
    t_h = jnp.concatenate([rel_joints, jnp.ones((B, J, 1, 1), dtype)], axis=2)
    transforms_mat = jnp.concatenate([rot_h, t_h], axis=3)            # (B, J, 4, 4)

    chain = [transforms_mat[:, 0]]
    for i in range(1, J):
        chain.append(jnp.matmul(chain[parents[i]], transforms_mat[:, i]))
    transforms = jnp.stack(chain, axis=1)                             # (B, J, 4, 4)
    posed_joints = transforms[:, :, :3, 3]

    joints_homogen = jnp.concatenate(
        [joints, jnp.zeros((B, J, 1, 1), dtype)], axis=2)             # (B, J, 4, 1)
    tj = jnp.matmul(transforms, joints_homogen)                       # (B, J, 4, 1)
    rel_transforms = transforms - jnp.concatenate(
        [jnp.zeros((B, J, 4, 3), dtype), tj], axis=3)
    return posed_joints, rel_transforms


def init_flame_params(key):
    """Deterministic synthetic FLAME buffers (shapes per the module __init__)."""
    ks = jax.random.split(key, 6)
    factor = 4.0
    v_template = jax.random.normal(ks[0], (V, 3), jnp.float32) * 0.1 * factor
    shapedirs = jax.random.normal(ks[1], (V, 3, NB), jnp.float32) * 0.01 * factor
    posedirs = jax.random.normal(ks[2], (POSE_FEAT, 3 * V), jnp.float32) * 0.01 * factor
    j_regressor = jax.nn.softmax(
        jax.random.normal(ks[3], (J, V), jnp.float32), axis=-1)
    lbs_weights = jax.nn.softmax(
        jax.random.normal(ks[4], (V, J), jnp.float32), axis=-1)
    shape_params = jax.random.normal(ks[5], (1, N_SHAPE), jnp.float32) * 0.1

    # __init__ pre-deforms v_template with the provided shape params
    sd_flat_aos = shapedirs.reshape(3 * V, NB)              # row index = 3*v + k
    v_template = v_template + (shape_params @ sd_flat_aos[:, :N_SHAPE].T).reshape(V, 3)

    # ---- kernel-side precomputed buffers (SoA, fused, folded) ----
    vt_soa = v_template.T.reshape(1, 3 * V)                              # col = k*V + v
    shapedirs_soa = jnp.transpose(shapedirs, (2, 1, 0)).reshape(NB, 3 * V)
    posedirs_soa = posedirs.reshape(POSE_FEAT, V, 3).transpose(0, 2, 1).reshape(
        POSE_FEAT, 3 * V)
    dirs_soa = jnp.concatenate([shapedirs_soa, posedirs_soa], axis=0)    # (52, 3V)

    # folded joint regression: joints_flat = jnt_template + betas @ jnt_dirs
    jnt_template = (j_regressor @ v_template).reshape(1, 3 * J)          # (1, 3J)
    jnt_dirs = jnp.einsum('jv,vkn->njk', j_regressor, shapedirs).reshape(NB, 3 * J)

    return dict(
        # reference-side (PyTorch-native layouts)
        v_template=v_template,                 # (V, 3)
        shapedirs=shapedirs,                   # (V, 3, NB)
        posedirs_aos=posedirs,                 # (36, 3V), col = 3*v + k
        j_regressor=j_regressor,               # (J, V)
        lbs_weights=lbs_weights,               # (V, J)
        # kernel-side
        vt_soa=vt_soa,                         # (1, 3V)
        dirs_soa=dirs_soa,                     # (52, 3V)
        wT=lbs_weights.T,                      # (J, V)
        jnt_template=jnt_template,             # (1, 3J)
        jnt_dirs=jnt_dirs,                     # (NB, 3J)
    )


def _flame_forward_impl(expression_params, pose_params, P):
    """Matches FLAME.forward: returns (vertices, pose_feature, transforms)."""
    B = expression_params.shape[0]
    shape_z = jnp.zeros((B, N_SHAPE), expression_params.dtype)
    betas = jnp.concatenate([shape_z, expression_params], axis=1)      # (B, NB)

    rot_mats = batch_rodrigues(pose_params.reshape(-1, 3)).reshape(B, J, 3, 3)
    ident = jnp.eye(3, dtype=jnp.float32)
    pose_feature = (rot_mats[:, 1:] - ident).reshape(B, POSE_FEAT)     # (B, 36)

    # folded joint regression (tiny: (B,16)@(16,15)) -> plain JAX
    joints = (P['jnt_template'] + betas @ P['jnt_dirs']).reshape(B, J, 3)
    _, A = batch_rigid_transform(rot_mats, joints)                     # (B, J, 4, 4)

    # fused blendshape + skinning kernel
    coeffs = jnp.concatenate([betas, pose_feature], axis=1)            # (B, 52)
    a2 = A.reshape(B, J, 16).transpose(0, 2, 1).reshape(B * 16, J)     # (B*16, J)
    verts_soa = flame_fused_pallas(coeffs, a2, P['dirs_soa'], P['vt_soa'], P['wT'])
    vertices = jnp.transpose(verts_soa, (0, 2, 1))                     # (B, V, 3)
    # TODO(synk): ghostbone=True branch (prepend identity transform) not exercised.
    return vertices, pose_feature, A


flame_forward = jax.jit(_flame_forward_impl)


# ------------------------- pure-JAX reference -------------------------
def flame_forward_ref(expression_params, pose_params, P):
    B = expression_params.shape[0]
    betas = jnp.concatenate(
        [jnp.zeros((B, N_SHAPE), expression_params.dtype), expression_params], axis=1)
    v_shaped = P['v_template'][None] + jnp.einsum('bl,vkl->bvk', betas, P['shapedirs'])
    joints = jnp.einsum('jv,bvk->bjk', P['j_regressor'], v_shaped)
    rot_mats = batch_rodrigues(pose_params.reshape(-1, 3)).reshape(B, J, 3, 3)
    pose_feature = (rot_mats[:, 1:] - jnp.eye(3, dtype=jnp.float32)).reshape(B, POSE_FEAT)
    v_posed = v_shaped + (pose_feature @ P['posedirs_aos']).reshape(B, V, 3)
    _, A = batch_rigid_transform(rot_mats, joints)
    T = jnp.einsum('vj,bjik->bvik', P['lbs_weights'], A)               # (B, V, 4, 4)
    vph = jnp.concatenate([v_posed, jnp.ones((B, V, 1), jnp.float32)], axis=-1)
    verts = jnp.einsum('bvij,bvj->bvi', T, vph)[..., :3]
    return verts, pose_feature, A


if __name__ == "__main__":
    key = jax.random.PRNGKey(0)
    k_param, k_exp, k_pose = jax.random.split(key, 3)
    P = init_flame_params(k_param)

    B = 2
    expression_params = jax.random.normal(k_exp, (B, N_EXP), jnp.float32) * 0.5
    pose_params = jax.random.normal(k_pose, (B, POSE_DIM), jnp.float32) * 0.2

    vertices, pose_feature, transforms = flame_forward(expression_params, pose_params, P)
    vertices = jax.block_until_ready(vertices)
    pose_feature = jax.block_until_ready(pose_feature)
    transforms = jax.block_until_ready(transforms)

    assert vertices.shape == (B, V, 3)
    assert pose_feature.shape == (B, POSE_FEAT)
    assert transforms.shape == (B, J, 4, 4)

    v_ref, pf_ref, t_ref = flame_forward_ref(expression_params, pose_params, P)
    np.testing.assert_allclose(np.asarray(vertices), np.asarray(v_ref),
                               rtol=1e-3, atol=1e-3)
    np.testing.assert_allclose(np.asarray(pose_feature), np.asarray(pf_ref),
                               rtol=1e-3, atol=1e-3)
    np.testing.assert_allclose(np.asarray(transforms), np.asarray(t_ref),
                               rtol=1e-3, atol=1e-3)

    print("KERNEL_OK")
</pallas_src>

<mosaic_0001>
module attributes {stable_mosaic.version = 11 : i64} {
  func.func @_flame_kernel(%arg0: memref<2x52xf32, #tpu.memory_space<vmem>>, %arg1: memref<32x5xf32, #tpu.memory_space<vmem>>, %arg2: memref<52x768xf32, #tpu.memory_space<vmem>>, %arg3: memref<1x768xf32, #tpu.memory_space<vmem>>, %arg4: memref<5x256xf32, #tpu.memory_space<vmem>>, %arg5: memref<2x3x256xf32, #tpu.memory_space<vmem>>) attributes {dimension_semantics = [], scalar_prefetch = 0 : i64, scratch_operands = 0 : i64, tpu.core_type = #tpu.core_type<tc>} {
    %c0 = arith.constant 0 : index
    %c0_0 = arith.constant 0 : index
    %0 = vector.load %arg3[%c0, %c0_0] : memref<1x768xf32, #tpu.memory_space<vmem>>, vector<1x768xf32>
    %c0_1 = arith.constant 0 : index
    %c0_2 = arith.constant 0 : index
    %1 = vector.load %arg0[%c0_1, %c0_2] : memref<2x52xf32, #tpu.memory_space<vmem>>, vector<2x52xf32>
    %c0_3 = arith.constant 0 : index
    %c0_4 = arith.constant 0 : index
    %2 = vector.load %arg2[%c0_3, %c0_4] : memref<52x768xf32, #tpu.memory_space<vmem>>, vector<52x768xf32>
    %cst = arith.constant dense<0.000000e+00> : vector<2x768xf32>
    %3 = tpu.matmul %1, %2, %cst {dimension_numbers = #tpu.dot_dimension_numbers<[1], [0], [0], [1], [0, 0, 1, 1], [], []>} : vector<2x52xf32>, vector<52x768xf32>, vector<2x768xf32> -> vector<2x768xf32>
    %4 = vector.broadcast %0 : vector<1x768xf32> to vector<2x768xf32>
    %5 = arith.addf %4, %3 : vector<2x768xf32>
    %c0_5 = arith.constant 0 : index
    %c0_6 = arith.constant 0 : index
    %6 = vector.load %arg1[%c0_5, %c0_6] : memref<32x5xf32, #tpu.memory_space<vmem>>, vector<32x5xf32>
    %c0_7 = arith.constant 0 : index
    %c0_8 = arith.constant 0 : index
    %7 = vector.load %arg4[%c0_7, %c0_8] : memref<5x256xf32, #tpu.memory_space<vmem>>, vector<5x256xf32>
    %cst_9 = arith.constant dense<0.000000e+00> : vector<32x256xf32>
    %8 = tpu.matmul %6, %7, %cst_9 {dimension_numbers = #tpu.dot_dimension_numbers<[1], [0], [0], [1], [0, 0, 1, 1], [], []>} : vector<32x5xf32>, vector<5x256xf32>, vector<32x256xf32> -> vector<32x256xf32>
    %9 = vector.extract_strided_slice %8 {offsets = [0, 0], sizes = [16, 256], strides = [1, 1]} : vector<32x256xf32> to vector<16x256xf32>
    %10 = vector.extract_strided_slice %5 {offsets = [0, 0], sizes = [1, 256], strides = [1, 1]} : vector<2x768xf32> to vector<1x256xf32>
    %11 = vector.extract_strided_slice %5 {offsets = [0, 256], sizes = [1, 256], strides = [1, 1]} : vector<2x768xf32> to vector<1x256xf32>
    %12 = vector.extract_strided_slice %5 {offsets = [0, 512], sizes = [1, 256], strides = [1, 1]} : vector<2x768xf32> to vector<1x256xf32>
    %13 = vector.extract_strided_slice %9 {offsets = [0, 0], sizes = [1, 256], strides = [1, 1]} : vector<16x256xf32> to vector<1x256xf32>
    %14 = arith.mulf %13, %10 : vector<1x256xf32>
    %15 = vector.extract_strided_slice %9 {offsets = [1, 0], sizes = [1, 256], strides = [1, 1]} : vector<16x256xf32> to vector<1x256xf32>
    %16 = arith.mulf %15, %11 : vector<1x256xf32>
    %17 = arith.addf %14, %16 : vector<1x256xf32>
    %18 = vector.extract_strided_slice %9 {offsets = [2, 0], sizes = [1, 256], strides = [1, 1]} : vector<16x256xf32> to vector<1x256xf32>
    %19 = arith.mulf %18, %12 : vector<1x256xf32>
    %20 = arith.addf %17, %19 : vector<1x256xf32>
    %21 = vector.extract_strided_slice %9 {offsets = [3, 0], sizes = [1, 256], strides = [1, 1]} : vector<16x256xf32> to vector<1x256xf32>
    %22 = arith.addf %20, %21 : vector<1x256xf32>
    %c0_10 = arith.constant 0 : index
    %c0_11 = arith.constant 0 : index
    %c0_12 = arith.constant 0 : index
    %23 = vector.load %arg5[%c0_10, %c0_11, %c0_12] : memref<2x3x256xf32, #tpu.memory_space<vmem>>, vector<1x1x256xf32>
    %24 = vector.shape_cast %23 : vector<1x1x256xf32> to vector<1x256xf32>
    %25 = vector.shape_cast %22 : vector<1x256xf32> to vector<1x1x256xf32>
    tpu.vector_store %arg5[%c0_10, %c0_11, %c0_12], %25 {strides = array<i32>} : memref<2x3x256xf32, #tpu.memory_space<vmem>>, vector<1x1x256xf32>,
    %26 = vector.extract_strided_slice %9 {offsets = [4, 0], sizes = [1, 256], strides = [1, 1]} : vector<16x256xf32> to vector<1x256xf32>
    %27 = arith.mulf %26, %10 : vector<1x256xf32>
    %28 = vector.extract_strided_slice %9 {offsets = [5, 0], sizes = [1, 256], strides = [1, 1]} : vector<16x256xf32> to vector<1x256xf32>
    %29 = arith.mulf %28, %11 : vector<1x256xf32>
    %30 = arith.addf %27, %29 : vector<1x256xf32>
    %31 = vector.extract_strided_slice %9 {offsets = [6, 0], sizes = [1, 256], strides = [1, 1]} : vector<16x256xf32> to vector<1x256xf32>
    %32 = arith.mulf %31, %12 : vector<1x256xf32>
    %33 = arith.addf %30, %32 : vector<1x256xf32>
    %34 = vector.extract_strided_slice %9 {offsets = [7, 0], sizes = [1, 256], strides = [1, 1]} : vector<16x256xf32> to vector<1x256xf32>
    %35 = arith.addf %33, %34 : vector<1x256xf32>
    %c0_13 = arith.constant 0 : index
    %c1 = arith.constant 1 : index
    %c0_14 = arith.constant 0 : index
    %36 = vector.load %arg5[%c0_13, %c1, %c0_14] : memref<2x3x256xf32, #tpu.memory_space<vmem>>, vector<1x1x256xf32>
    %37 = vector.shape_cast %36 : vector<1x1x256xf32> to vector<1x256xf32>
    %38 = vector.shape_cast %35 : vector<1x256xf32> to vector<1x1x256xf32>
    tpu.vector_store %arg5[%c0_13, %c1, %c0_14], %38 {strides = array<i32>} : memref<2x3x256xf32, #tpu.memory_space<vmem>>, vector<1x1x256xf32>,
    %39 = vector.extract_strided_slice %9 {offsets = [8, 0], sizes = [1, 256], strides = [1, 1]} : vector<16x256xf32> to vector<1x256xf32>
    %40 = arith.mulf %39, %10 : vector<1x256xf32>
    %41 = vector.extract_strided_slice %9 {offsets = [9, 0], sizes = [1, 256], strides = [1, 1]} : vector<16x256xf32> to vector<1x256xf32>
    %42 = arith.mulf %41, %11 : vector<1x256xf32>
    %43 = arith.addf %40, %42 : vector<1x256xf32>
    %44 = vector.extract_strided_slice %9 {offsets = [10, 0], sizes = [1, 256], strides = [1, 1]} : vector<16x256xf32> to vector<1x256xf32>
    %45 = arith.mulf %44, %12 : vector<1x256xf32>
    %46 = arith.addf %43, %45 : vector<1x256xf32>
    %47 = vector.extract_strided_slice %9 {offsets = [11, 0], sizes = [1, 256], strides = [1, 1]} : vector<16x256xf32> to vector<1x256xf32>
    %48 = arith.addf %46, %47 : vector<1x256xf32>
    %c0_15 = arith.constant 0 : index
    %c2 = arith.constant 2 : index
    %c0_16 = arith.constant 0 : index
    %49 = vector.load %arg5[%c0_15, %c2, %c0_16] : memref<2x3x256xf32, #tpu.memory_space<vmem>>, vector<1x1x256xf32>
    %50 = vector.shape_cast %49 : vector<1x1x256xf32> to vector<1x256xf32>
    %51 = vector.shape_cast %48 : vector<1x256xf32> to vector<1x1x256xf32>
    tpu.vector_store %arg5[%c0_15, %c2, %c0_16], %51 {strides = array<i32>} : memref<2x3x256xf32, #tpu.memory_space<vmem>>, vector<1x1x256xf32>,
    %52 = vector.extract_strided_slice %8 {offsets = [16, 0], sizes = [16, 256], strides = [1, 1]} : vector<32x256xf32> to vector<16x256xf32>
    %53 = vector.extract_strided_slice %5 {offsets = [1, 0], sizes = [1, 256], strides = [1, 1]} : vector<2x768xf32> to vector<1x256xf32>
    %54 = vector.extract_strided_slice %5 {offsets = [1, 256], sizes = [1, 256], strides = [1, 1]} : vector<2x768xf32> to vector<1x256xf32>
    %55 = vector.extract_strided_slice %5 {offsets = [1, 512], sizes = [1, 256], strides = [1, 1]} : vector<2x768xf32> to vector<1x256xf32>
    %56 = vector.extract_strided_slice %52 {offsets = [0, 0], sizes = [1, 256], strides = [1, 1]} : vector<16x256xf32> to vector<1x256xf32>
    %57 = arith.mulf %56, %53 : vector<1x256xf32>
    %58 = vector.extract_strided_slice %52 {offsets = [1, 0], sizes = [1, 256], strides = [1, 1]} : vector<16x256xf32> to vector<1x256xf32>
    %59 = arith.mulf %58, %54 : vector<1x256xf32>
    %60 = arith.addf %57, %59 : vector<1x256xf32>
    %61 = vector.extract_strided_slice %52 {offsets = [2, 0], sizes = [1, 256], strides = [1, 1]} : vector<16x256xf32> to vector<1x256xf32>
    %62 = arith.mulf %61, %55 : vector<1x256xf32>
    %63 = arith.addf %60, %62 : vector<1x256xf32>
    %64 = vector.extract_strided_slice %52 {offsets = [3, 0], sizes = [1, 256], strides = [1, 1]} : vector<16x256xf32> to vector<1x256xf32>
    %65 = arith.addf %63, %64 : vector<1x256xf32>
    %c1_17 = arith.constant 1 : index
    %c0_18 = arith.constant 0 : index
    %c0_19 = arith.constant 0 : index
    %66 = vector.load %arg5[%c1_17, %c0_18, %c0_19] : memref<2x3x256xf32, #tpu.memory_space<vmem>>, vector<1x1x256xf32>
    %67 = vector.shape_cast %66 : vector<1x1x256xf32> to vector<1x256xf32>
    %68 = vector.shape_cast %65 : vector<1x256xf32> to vector<1x1x256xf32>
    tpu.vector_store %arg5[%c1_17, %c0_18, %c0_19], %68 {strides = array<i32>} : memref<2x3x256xf32, #tpu.memory_space<vmem>>, vector<1x1x256xf32>,
    %69 = vector.extract_strided_slice %52 {offsets = [4, 0], sizes = [1, 256], strides = [1, 1]} : vector<16x256xf32> to vector<1x256xf32>
    %70 = arith.mulf %69, %53 : vector<1x256xf32>
    %71 = vector.extract_strided_slice %52 {offsets = [5, 0], sizes = [1, 256], strides = [1, 1]} : vector<16x256xf32> to vector<1x256xf32>
    %72 = arith.mulf %71, %54 : vector<1x256xf32>
    %73 = arith.addf %70, %72 : vector<1x256xf32>
    %74 = vector.extract_strided_slice %52 {offsets = [6, 0], sizes = [1, 256], strides = [1, 1]} : vector<16x256xf32> to vector<1x256xf32>
    %75 = arith.mulf %74, %55 : vector<1x256xf32>
    %76 = arith.addf %73, %75 : vector<1x256xf32>
    %77 = vector.extract_strided_slice %52 {offsets = [7, 0], sizes = [1, 256], strides = [1, 1]} : vector<16x256xf32> to vector<1x256xf32>
    %78 = arith.addf %76, %77 : vector<1x256xf32>
    %c1_20 = arith.constant 1 : index
    %c1_21 = arith.constant 1 : index
    %c0_22 = arith.constant 0 : index
    %79 = vector.load %arg5[%c1_20, %c1_21, %c0_22] : memref<2x3x256xf32, #tpu.memory_space<vmem>>, vector<1x1x256xf32>
    %80 = vector.shape_cast %79 : vector<1x1x256xf32> to vector<1x256xf32>
    %81 = vector.shape_cast %78 : vector<1x256xf32> to vector<1x1x256xf32>
    tpu.vector_store %arg5[%c1_20, %c1_21, %c0_22], %81 {strides = array<i32>} : memref<2x3x256xf32, #tpu.memory_space<vmem>>, vector<1x1x256xf32>,
    %82 = vector.extract_strided_slice %52 {offsets = [8, 0], sizes = [1, 256], strides = [1, 1]} : vector<16x256xf32> to vector<1x256xf32>
    %83 = arith.mulf %82, %53 : vector<1x256xf32>
    %84 = vector.extract_strided_slice %52 {offsets = [9, 0], sizes = [1, 256], strides = [1, 1]} : vector<16x256xf32> to vector<1x256xf32>
    %85 = arith.mulf %84, %54 : vector<1x256xf32>
    %86 = arith.addf %83, %85 : vector<1x256xf32>
    %87 = vector.extract_strided_slice %52 {offsets = [10, 0], sizes = [1, 256], strides = [1, 1]} : vector<16x256xf32> to vector<1x256xf32>
    %88 = arith.mulf %87, %55 : vector<1x256xf32>
    %89 = arith.addf %86, %88 : vector<1x256xf32>
    %90 = vector.extract_strided_slice %52 {offsets = [11, 0], sizes = [1, 256], strides = [1, 1]} : vector<16x256xf32> to vector<1x256xf32>
    %91 = arith.addf %89, %90 : vector<1x256xf32>
    %c1_23 = arith.constant 1 : index
    %c2_24 = arith.constant 2 : index
    %c0_25 = arith.constant 0 : index
    %92 = vector.load %arg5[%c1_23, %c2_24, %c0_25] : memref<2x3x256xf32, #tpu.memory_space<vmem>>, vector<1x1x256xf32>
    %93 = vector.shape_cast %92 : vector<1x1x256xf32> to vector<1x256xf32>
    %94 = vector.shape_cast %91 : vector<1x256xf32> to vector<1x1x256xf32>
    tpu.vector_store %arg5[%c1_23, %c2_24, %c0_25], %94 {strides = array<i32>} : memref<2x3x256xf32, #tpu.memory_space<vmem>>, vector<1x1x256xf32>,
    return
  }
}

</mosaic_0001>

<llo_original>
// kernel: _flame_forward_impl.1
$region0: #{_flame_forward_impl.1}
  #allocation0 [shape = 'u32[]', space=smem, size = 0x4, offset = 0x4, fixed_abs, tag = 'smem constant byte address 0x4 - core index']
  #allocation1 [shape = 'u32[144,128]{1,0:T(1,128)}', space=vmem, size = 0x12000, scoped, tag = 'internal scratch']
  %s0 = inlined_call_operand.vmem [shape: f32[2,52], index: 0, kind: input, shape index: {}]
  %s1 = inlined_call_operand.vmem [shape: f32[32,5], index: 1, kind: input, shape index: {}]
  %s2 = inlined_call_operand.vmem [shape: f32[52,768], index: 2, kind: input, shape index: {}]
  %s3 = inlined_call_operand.vmem [shape: f32[1,768], index: 3, kind: input, shape index: {}]
  %s4 = inlined_call_operand.vmem [shape: f32[5,256], index: 4, kind: input, shape index: {}]
  %s5 = inlined_call_operand.vmem [shape: f32[2,3,256], index: 5, kind: output, shape index: {}]
  %s6 = sld [smem:[#allocation0]]
  $region30: #{_flame_forward_impl.1} parent=0
    _
  %s8 = ssub.s32 1, %s6
  %s9 = scalar_select 0, %s8, %s6
  // Predicated region
  $region2: #{_flame_forward_impl.1} parent=0 // pred_check
    _
  $region3: #{_flame_forward_impl.1} parent=0 // pred_check_branch
    %11 = sbr.rel (0) target = $region5
  $region4: #{_flame_forward_impl.1} parent=0 // pred_region
    _
  $region5: #{_flame_forward_impl.1} parent=0 // pred_fallthru
    _
  // Predicated region
  $region6: #{_flame_forward_impl.1} parent=0 // pred_check
    _
  $region7: #{_flame_forward_impl.1} parent=0 // pred_check_branch
    %13 = sbr.rel (0) target = $region9
  $region8: #{_flame_forward_impl.1} parent=0 // pred_region
    _
  $region9: #{_flame_forward_impl.1} parent=0 // pred_fallthru
    _
  // Predicated region
  $region10: #{_flame_forward_impl.1} parent=0 // pred_check
    _
  $region11: #{_flame_forward_impl.1} parent=0 // pred_check_branch
    %15 = sbr.rel (0) target = $region13
  $region12: #{_flame_forward_impl.1} parent=0 // pred_region
    _
  $region13: #{_flame_forward_impl.1} parent=0 // pred_fallthru
    _
  // Predicated region
  $region14: #{_flame_forward_impl.1} parent=0 // pred_check
    _
  $region15: #{_flame_forward_impl.1} parent=0 // pred_check_branch
    %17 = sbr.rel (0) target = $region17
  $region16: #{_flame_forward_impl.1} parent=0 // pred_region
    _
  $region17: #{_flame_forward_impl.1} parent=0 // pred_fallthru
    _
  // Predicated region
  $region18: #{_flame_forward_impl.1} parent=0 // pred_check
    _
  $region19: #{_flame_forward_impl.1} parent=0 // pred_check_branch
    %19 = sbr.rel (0) target = $region21
  $region20: #{_flame_forward_impl.1} parent=0 // pred_region
    _
  $region21: #{_flame_forward_impl.1} parent=0 // pred_fallthru
    _
  %v20 = vld [vmem:[%s3] sm:$0x3f]
  %v21 = vld [vmem:[%s0] sm:$0x3]
  %v22 = vld [vmem:[%s2] sm:$0xff]
  %v23 = vld [vmem:[%s2 + $0x8] sm:$0xff]
  %v24 = vld [vmem:[%s2 + $0x10] sm:$0xff]
  %v25 = vld [vmem:[%s2 + $0x18] sm:$0xff]
  %v26 = vld [vmem:[%s2 + $0x20] sm:$0xff]
  %v27 = vld [vmem:[%s2 + $0x28] sm:$0xff]
  %v28 = vld [vmem:[%s2 + $0x30] sm:$0xff]
  %v29 = vld [vmem:[%s2 + $0x38] sm:$0xff]
  %v30 = vld [vmem:[%s2 + $0x40] sm:$0xff]
  %v31 = vld [vmem:[%s2 + $0x48] sm:$0xff]
  %v32 = vld [vmem:[%s2 + $0x50] sm:$0xff]
  %v33 = vld [vmem:[%s2 + $0x58] sm:$0xff]
  %v34 = vld [vmem:[%s2 + $0x60] sm:$0xff]
  %v35 = vld [vmem:[%s2 + $0x68] sm:$0xff]
  %v36 = vld [vmem:[%s2 + $0x70] sm:$0xff]
  %v37 = vld [vmem:[%s2 + $0x78] sm:$0xff]
  %v38 = vld [vmem:[%s2 + $0x80] sm:$0xff]
  %v39 = vld [vmem:[%s2 + $0x88] sm:$0xff]
  %v40 = vld [vmem:[%s2 + $0x90] sm:$0xff]
  %v41 = vld [vmem:[%s2 + $0x98] sm:$0xff]
  %v42 = vld [vmem:[%s2 + $0xa0] sm:$0xff]
  %v43 = vld [vmem:[%s2 + $0xa8] sm:$0xff]
  %v44 = vld [vmem:[%s2 + $0xb0] sm:$0xff]
  %v45 = vld [vmem:[%s2 + $0xb8] sm:$0xff]
  %v46 = vld [vmem:[%s2 + $0xc0] sm:$0xff]
  %v47 = vld [vmem:[%s2 + $0xc8] sm:$0xff]
  %v48 = vld [vmem:[%s2 + $0xd0] sm:$0xff]
  %v49 = vld [vmem:[%s2 + $0xd8] sm:$0xff]
  %v50 = vld [vmem:[%s2 + $0xe0] sm:$0xff]
  %v51 = vld [vmem:[%s2 + $0xe8] sm:$0xff]
  %v52 = vld [vmem:[%s2 + $0xf0] sm:$0xff]
  %v53 = vld [vmem:[%s2 + $0xf8] sm:$0xff]
  %v54 = vld [vmem:[%s2 + $0x100] sm:$0xff]
  %v55 = vld [vmem:[%s2 + $0x108] sm:$0xff]
  %v56 = vld [vmem:[%s2 + $0x110] sm:$0xff]
  %v57 = vld [vmem:[%s2 + $0x118] sm:$0xff]
  %v58 = vld [vmem:[%s2 + $0x120] sm:$0xf]
  %v59 = vld [vmem:[%s2 + $0x128] sm:$0xf]
  %v60 = vld [vmem:[%s2 + $0x130] sm:$0xf]
  %v61 = vld [vmem:[%s2 + $0x138] sm:$0xf]
  %v62 = vld [vmem:[%s2 + $0x140] sm:$0xf]
  %v63 = vld [vmem:[%s2 + $0x148] sm:$0xf]
  %vm64 = vcmask 424960
  %v66 = vsel %vm64, %v21, 0
  %vm68 = vcmask 1043456
  %v70 = vsel %vm68, %v58, 0
  %v73 = vsel %vm68, %v59, 0
  %v76 = vsel %vm68, %v60, 0
  %v79 = vsel %vm68, %v61, 0
  %v82 = vsel %vm68, %v62, 0
  %v85 = vsel %vm68, %v63, 0
  %87 = vmatprep.subr.mxu0 0.0
  %88 = vmatpush1.msra.mxu0 0.0
  %89 = vmatprep.subr.mxu0 0.0
  %90 = vmatpush1.msra.mxu0 0.0
  %91 = vmatprep.subr.mxu0 0.0
  %92 = vmatpush1.msra.mxu0 0.0
  %93 = vmatprep.subr.mxu0 0.0
  %94 = vmatpush1.msra.mxu0 0.0
  %95 = vmatprep.subr.mxu0 0.0
  %96 = vmatpush1.msra.mxu0 0.0
  %97 = vmatprep.subr.mxu0 0.0
  %98 = vmatpush1.msra.mxu0 0.0
  %99 = vmatprep.subr.mxu0 0.0
  %100 = vmatpush1.msra.mxu0 0.0
  %101 = vmatprep.subr.mxu0 0.0
  %102 = vmatpush1.msra.mxu0 0.0
  %103 = vmatprep.subr.mxu0 0.0
  %104 = vmatpush1.msra.mxu0 0.0
  %105 = vmatprep.subr.mxu0 %v73
  %106 = vmatpush1.msra.mxu0 %v70
  %107 = vmatprep.subr.mxu0 %v53
  %108 = vmatpush1.msra.mxu0 %v52
  %109 = vmatprep.subr.mxu0 %v47
  %110 = vmatpush1.msra.mxu0 %v46
  %111 = vmatprep.subr.mxu0 %v41
  %112 = vmatpush1.msra.mxu0 %v40
  %113 = vmatprep.subr.mxu0 %v35
  %114 = vmatpush1.msra.mxu0 %v34
  %115 = vmatprep.subr.mxu0 %v29
  %116 = vmatpush1.msra.mxu0 %v28
  %117 = vmatprep.subr.mxu0 %v23
  %118 = vmatpush1.msra.mxu0 %v22
  %119 = vmatprep.subr.mxu0 0.0
  %120 = vmatpush2.msra.mxu0 0.0
  %121 = vmatprep.subr.mxu0 0.0
  %122 = vmatpush2.msra.mxu0 0.0
  %123 = vmatprep.subr.mxu0 0.0
  %124 = vmatpush2.msra.mxu0 0.0
  %125 = vmatprep.subr.mxu0 0.0
  %126 = vmatpush2.msra.mxu0 0.0
  %127 = vmatprep.subr.mxu0 0.0
  %128 = vmatpush2.msra.mxu0 0.0
  %129 = vmatprep.subr.mxu0 0.0
  %130 = vmatpush2.msra.mxu0 0.0
  %131 = vmatprep.subr.mxu0 0.0
  %132 = vmatpush2.msra.mxu0 0.0
  %133 = vmatprep.subr.mxu0 0.0
  %134 = vmatpush2.msra.mxu0 0.0
  %135 = vmatprep.subr.mxu0 0.0
  %136 = vmatpush2.msra.mxu0 0.0
  %137 = vmatprep.subr.mxu0 0.0
  %138 = vmatpush2.msra.mxu0 0.0
  %139 = vmatprep.subr.mxu0 0.0
  %140 = vmatpush2.msra.mxu0 0.0
  %141 = vmatprep.subr.mxu0 0.0
  %142 = vmatpush2.msra.mxu0 0.0
  %143 = vmatprep.subr.mxu0 0.0
  %144 = vmatpush2.msra.mxu0 0.0
  %145 = vmatprep.subr.mxu0 0.0
  %146 = vmatpush2.msra.mxu0 0.0
  %147 = vmatprep.subr.mxu0 0.0
  %148 = vmatpush2.msra.mxu0 0.0
  %149 = vmatprep.subr.mxu0 0.0
  %150 = vmatpush2.msra.mxu0 0.0
  %151 = vmatprep.mubr.f32.mxu0 0.0
  %152 = vmatmul.mubr.f32.gmra.mxu0 %v66
  %v153 = vpop.f32.mrf.mxu0
  %v154 = vadd.f32 0.0, %v153
  %v155 = vpop.f32.mrf.mxu0
  %v156 = vadd.f32 0.0, %v155
  %157 = vdwg.mxu0
  %158 = vmatprep.subr.mxu0 0.0
  %159 = vmatpush1.msra.mxu0 0.0
  %160 = vmatprep.subr.mxu0 0.0
  %161 = vmatpush1.msra.mxu0 0.0
  %162 = vmatprep.subr.mxu0 0.0
  %163 = vmatpush1.msra.mxu0 0.0
  %164 = vmatprep.subr.mxu0 0.0
  %165 = vmatpush1.msra.mxu0 0.0
  %166 = vmatprep.subr.mxu0 0.0
  %167 = vmatpush1.msra.mxu0 0.0
  %168 = vmatprep.subr.mxu0 0.0
  %169 = vmatpush1.msra.mxu0 0.0
  %170 = vmatprep.subr.mxu0 0.0
  %171 = vmatpush1.msra.mxu0 0.0
  %172 = vmatprep.subr.mxu0 0.0
  %173 = vmatpush1.msra.mxu0 0.0
  %174 = vmatprep.subr.mxu0 0.0
  %175 = vmatpush1.msra.mxu0 0.0
  %176 = vmatprep.subr.mxu0 %v79
  %177 = vmatpush1.msra.mxu0 %v76
  %178 = vmatprep.subr.mxu0 %v55
  %179 = vmatpush1.msra.mxu0 %v54
  %180 = vmatprep.subr.mxu0 %v49
  %181 = vmatpush1.msra.mxu0 %v48
  %182 = vmatprep.subr.mxu0 %v43
  %183 = vmatpush1.msra.mxu0 %v42
  %184 = vmatprep.subr.mxu0 %v37
  %185 = vmatpush1.msra.mxu0 %v36
  %186 = vmatprep.subr.mxu0 %v31
  %187 = vmatpush1.msra.mxu0 %v30
  %188 = vmatprep.subr.mxu0 %v25
  %189 = vmatpush1.msra.mxu0 %v24
  %190 = vmatprep.subr.mxu0 0.0
  %191 = vmatpush2.msra.mxu0 0.0
  %192 = vmatprep.subr.mxu0 0.0
  %193 = vmatpush2.msra.mxu0 0.0
  %194 = vmatprep.subr.mxu0 0.0
  %195 = vmatpush2.msra.mxu0 0.0
  %196 = vmatprep.subr.mxu0 0.0
  %197 = vmatpush2.msra.mxu0 0.0
  %198 = vmatprep.subr.mxu0 0.0
  %199 = vmatpush2.msra.mxu0 0.0
  %200 = vmatprep.subr.mxu0 0.0
  %201 = vmatpush2.msra.mxu0 0.0
  %202 = vmatprep.subr.mxu0 0.0
  %203 = vmatpush2.msra.mxu0 0.0
  %204 = vmatprep.subr.mxu0 0.0
  %205 = vmatpush2.msra.mxu0 0.0
  %206 = vmatprep.subr.mxu0 0.0
  %207 = vmatpush2.msra.mxu0 0.0
  %208 = vmatprep.subr.mxu0 0.0
  %209 = vmatpush2.msra.mxu0 0.0
  %210 = vmatprep.subr.mxu0 0.0
  %211 = vmatpush2.msra.mxu0 0.0
  %212 = vmatprep.subr.mxu0 0.0
  %213 = vmatpush2.msra.mxu0 0.0
  %214 = vmatprep.subr.mxu0 0.0
  %215 = vmatpush2.msra.mxu0 0.0
  %216 = vmatprep.subr.mxu0 0.0
  %217 = vmatpush2.msra.mxu0 0.0
  %218 = vmatprep.subr.mxu0 0.0
  %219 = vmatpush2.msra.mxu0 0.0
  %220 = vmatprep.subr.mxu0 0.0
  %221 = vmatpush2.msra.mxu0 0.0
  %222 = vmatprep.mubr.f32.mxu0 0.0
  %223 = vmatmul.mubr.f32.gmra.mxu0 %v66
  %v224 = vpop.f32.mrf.mxu0
  %v225 = vadd.f32 0.0, %v224
  %v226 = vpop.f32.mrf.mxu0
  %v227 = vadd.f32 0.0, %v226
  %228 = vdwg.mxu0
  %229 = vmatprep.subr.mxu0 0.0
  %230 = vmatpush1.msra.mxu0 0.0
  %231 = vmatprep.subr.mxu0 0.0
  %232 = vmatpush1.msra.mxu0 0.0
  %233 = vmatprep.subr.mxu0 0.0
  %234 = vmatpush1.msra.mxu0 0.0
  %235 = vmatprep.subr.mxu0 0.0
  %236 = vmatpush1.msra.mxu0 0.0
  %237 = vmatprep.subr.mxu0 0.0
  %238 = vmatpush1.msra.mxu0 0.0
  %239 = vmatprep.subr.mxu0 0.0
  %240 = vmatpush1.msra.mxu0 0.0
  %241 = vmatprep.subr.mxu0 0.0
  %242 = vmatpush1.msra.mxu0 0.0
  %243 = vmatprep.subr.mxu0 0.0
  %244 = vmatpush1.msra.mxu0 0.0
  %245 = vmatprep.subr.mxu0 0.0
  %246 = vmatpush1.msra.mxu0 0.0
  %247 = vmatprep.subr.mxu0 %v85
  %248 = vmatpush1.msra.mxu0 %v82
  %249 = vmatprep.subr.mxu0 %v57
  %250 = vmatpush1.msra.mxu0 %v56
  %251 = vmatprep.subr.mxu0 %v51
  %252 = vmatpush1.msra.mxu0 %v50
  %253 = vmatprep.subr.mxu0 %v45
  %254 = vmatpush1.msra.mxu0 %v44
  %255 = vmatprep.subr.mxu0 %v39
  %256 = vmatpush1.msra.mxu0 %v38
  %257 = vmatprep.subr.mxu0 %v33
  %258 = vmatpush1.msra.mxu0 %v32
  %259 = vmatprep.subr.mxu0 %v27
  %260 = vmatpush1.msra.mxu0 %v26
  %261 = vmatprep.subr.mxu0 0.0
  %262 = vmatpush2.msra.mxu0 0.0
  %263 = vmatprep.subr.mxu0 0.0
  %264 = vmatpush2.msra.mxu0 0.0
  %265 = vmatprep.subr.mxu0 0.0
  %266 = vmatpush2.msra.mxu0 0.0
  %267 = vmatprep.subr.mxu0 0.0
  %268 = vmatpush2.msra.mxu0 0.0
  %269 = vmatprep.subr.mxu0 0.0
  %270 = vmatpush2.msra.mxu0 0.0
  %271 = vmatprep.subr.mxu0 0.0
  %272 = vmatpush2.msra.mxu0 0.0
  %273 = vmatprep.subr.mxu0 0.0
  %274 = vmatpush2.msra.mxu0 0.0
  %275 = vmatprep.subr.mxu0 0.0
  %276 = vmatpush2.msra.mxu0 0.0
  %277 = vmatprep.subr.mxu0 0.0
  %278 = vmatpush2.msra.mxu0 0.0
  %279 = vmatprep.subr.mxu0 0.0
  %280 = vmatpush2.msra.mxu0 0.0
  %281 = vmatprep.subr.mxu0 0.0
  %282 = vmatpush2.msra.mxu0 0.0
  %283 = vmatprep.subr.mxu0 0.0
  %284 = vmatpush2.msra.mxu0 0.0
  %285 = vmatprep.subr.mxu0 0.0
  %286 = vmatpush2.msra.mxu0 0.0
  %287 = vmatprep.subr.mxu0 0.0
  %288 = vmatpush2.msra.mxu0 0.0
  %289 = vmatprep.subr.mxu0 0.0
  %290 = vmatpush2.msra.mxu0 0.0
  %291 = vmatprep.subr.mxu0 0.0
  %292 = vmatpush2.msra.mxu0 0.0
  %293 = vmatprep.mubr.f32.mxu0 0.0
  %294 = vmatmul.mubr.f32.gmra.mxu0 %v66
  %v295 = vpop.f32.mrf.mxu0
  %v296 = vadd.f32 0.0, %v295
  %v297 = vpop.f32.mrf.mxu0
  %v298 = vadd.f32 0.0, %v297
  %299 = vdwg.mxu0
  %v301 = vlaneseq
  %v302 = vshrl.u32 %v301, 7
  %v303 = vsub.s32 0, %v302
  %v304 = vrot.slane %v20, %v303
  %v305 = vlaneseq
  %v306 = vshrl.u32 %v305, 7
  %v307 = vsub.s32 1, %v306
  %v308 = vrot.slane %v20, %v307
  %v309 = vlaneseq
  %v310 = vshrl.u32 %v309, 7
  %v311 = vsub.s32 2, %v310
  %v312 = vrot.slane %v20, %v311
  %v313 = vlaneseq
  %v314 = vshrl.u32 %v313, 7
  %v315 = vsub.s32 3, %v314
  %v316 = vrot.slane %v20, %v315
  %v317 = vlaneseq
  %v318 = vshrl.u32 %v317, 7
  %v319 = vsub.s32 4, %v318
  %v320 = vrot.slane %v20, %v319
  %v321 = vlaneseq
  %v322 = vshrl.u32 %v321, 7
  %v323 = vsub.s32 5, %v322
  %v324 = vrot.slane %v20, %v323
  %v331 = vadd.f32 %v304, %v154
  %v332 = vadd.f32 %v308, %v156
  %v333 = vadd.f32 %v312, %v225
  %v334 = vadd.f32 %v316, %v227
  %v335 = vadd.f32 %v320, %v296
  %v336 = vadd.f32 %v324, %v298
  %v337 = vld [vmem:[%s1] sm:$0xff]
  %v338 = vld [vmem:[%s1 + $0x8] sm:$0xff]
  %v339 = vld [vmem:[%s1 + $0x10] sm:$0xff]
  %v340 = vld [vmem:[%s1 + $0x18] sm:$0xff]
  %v341 = vld [vmem:[%s4] sm:$0x1f]
  %v342 = vld [vmem:[%s4 + $0x8] sm:$0x1f]
  %vm343 = vcmask 39936
  %v345 = vsel %vm343, %v337, 0
  %v348 = vsel %vm343, %v338, 0
  %v351 = vsel %vm343, %v339, 0
  %v354 = vsel %vm343, %v340, 0
  %vm356 = vcmask 1044480
  %v358 = vsel %vm356, %v341, 0
  %v361 = vsel %vm356, %v342, 0
  %363 = vmatprep.subr.mxu0 0.0
  %364 = vmatpush1.msra.mxu0 0.0
  %365 = vmatprep.subr.mxu0 0.0
  %366 = vmatpush1.msra.mxu0 0.0
  %367 = vmatprep.subr.mxu0 0.0
  %368 = vmatpush1.msra.mxu0 0.0
  %369 = vmatprep.subr.mxu0 0.0
  %370 = vmatpush1.msra.mxu0 0.0
  %371 = vmatprep.subr.mxu0 0.0
  %372 = vmatpush1.msra.mxu0 0.0
  %373 = vmatprep.subr.mxu0 0.0
  %374 = vmatpush1.msra.mxu0 0.0
  %375 = vmatprep.subr.mxu0 0.0
  %376 = vmatpush1.msra.mxu0 0.0
  %377 = vmatprep.subr.mxu0 0.0
  %378 = vmatpush1.msra.mxu0 0.0
  %379 = vmatprep.subr.mxu0 0.0
  %380 = vmatpush1.msra.mxu0 0.0
  %381 = vmatprep.subr.mxu0 0.0
  %382 = vmatpush1.msra.mxu0 0.0
  %383 = vmatprep.subr.mxu0 0.0
  %384 = vmatpush1.msra.mxu0 0.0
  %385 = vmatprep.subr.mxu0 0.0
  %386 = vmatpush1.msra.mxu0 0.0
  %387 = vmatprep.subr.mxu0 0.0
  %388 = vmatpush1.msra.mxu0 0.0
  %389 = vmatprep.subr.mxu0 0.0
  %390 = vmatpush1.msra.mxu0 0.0
  %391 = vmatprep.subr.mxu0 0.0
  %392 = vmatpush1.msra.mxu0 0.0
  %393 = vmatprep.subr.mxu0 %v361
  %394 = vmatpush1.msra.mxu0 %v358
  %395 = vmatprep.subr.mxu0 0.0
  %396 = vmatpush2.msra.mxu0 0.0
  %397 = vmatprep.subr.mxu0 0.0
  %398 = vmatpush2.msra.mxu0 0.0
  %399 = vmatprep.subr.mxu0 0.0
  %400 = vmatpush2.msra.mxu0 0.0
  %401 = vmatprep.subr.mxu0 0.0
  %402 = vmatpush2.msra.mxu0 0.0
  %403 = vmatprep.subr.mxu0 0.0
  %404 = vmatpush2.msra.mxu0 0.0
  %405 = vmatprep.subr.mxu0 0.0
  %406 = vmatpush2.msra.mxu0 0.0
  %407 = vmatprep.subr.mxu0 0.0
  %408 = vmatpush2.msra.mxu0 0.0
  %409 = vmatprep.subr.mxu0 0.0
  %410 = vmatpush2.msra.mxu0 0.0
  %411 = vmatprep.subr.mxu0 0.0
  %412 = vmatpush2.msra.mxu0 0.0
  %413 = vmatprep.subr.mxu0 0.0
  %414 = vmatpush2.msra.mxu0 0.0
  %415 = vmatprep.subr.mxu0 0.0
  %416 = vmatpush2.msra.mxu0 0.0
  %417 = vmatprep.subr.mxu0 0.0
  %418 = vmatpush2.msra.mxu0 0.0
  %419 = vmatprep.subr.mxu0 0.0
  %420 = vmatpush2.msra.mxu0 0.0
  %421 = vmatprep.subr.mxu0 0.0
  %422 = vmatpush2.msra.mxu0 0.0
  %423 = vmatprep.subr.mxu0 0.0
  %424 = vmatpush2.msra.mxu0 0.0
  %425 = vmatprep.subr.mxu0 0.0
  %426 = vmatpush2.msra.mxu0 0.0
  %427 = vmatprep.mubr.f32.mxu0 0.0
  %428 = vmatmul.mubr.f32.gmra.mxu0 %v345
  %v429 = vpop.f32.mrf.mxu0
  %v430 = vadd.f32 0.0, %v429
  %v431 = vpop.f32.mrf.mxu0
  %v432 = vadd.f32 0.0, %v431
  %433 = vmatprep.mubr.f32.mxu0 0.0
  %434 = vmatmul.mubr.f32.gmra.mxu0 %v348
  %v435 = vpop.f32.mrf.mxu0
  %v436 = vadd.f32 0.0, %v435
  %v437 = vpop.f32.mrf.mxu0
  %v438 = vadd.f32 0.0, %v437
  %439 = vmatprep.mubr.f32.mxu0 0.0
  %440 = vmatmul.mubr.f32.gmra.mxu0 %v351
  %v441 = vpop.f32.mrf.mxu0
  %v442 = vadd.f32 0.0, %v441
  %v443 = vpop.f32.mrf.mxu0
  %v444 = vadd.f32 0.0, %v443
  %445 = vmatprep.mubr.f32.mxu0 0.0
  %446 = vmatmul.mubr.f32.gmra.mxu0 %v354
  %v447 = vpop.f32.mrf.mxu0
  %v448 = vadd.f32 0.0, %v447
  %v449 = vpop.f32.mrf.mxu0
  %v450 = vadd.f32 0.0, %v449
  %451 = vdwg.mxu0
  %v452 = vmul.f32 %v430, %v331
  %v453 = vmul.f32 %v432, %v332
  %v456 = vrot.slane %v333, 7
  %v457 = vrot.slane %v334, 7
  %v460 = vmul.f32 %v430, %v456
  %v461 = vmul.f32 %v432, %v457
  %v464 = vrot.slane %v460, 1
  %v465 = vrot.slane %v461, 1
  %v468 = vadd.f32 %v452, %v464
  %v469 = vadd.f32 %v453, %v465
  %v472 = vrot.slane %v335, 6
  %v473 = vrot.slane %v336, 6
  %v476 = vmul.f32 %v430, %v472
  %v477 = vmul.f32 %v432, %v473
  %v480 = vrot.slane %v476, 2
  %v481 = vrot.slane %v477, 2
  %v484 = vadd.f32 %v468, %v480
  %v485 = vadd.f32 %v469, %v481
  %v488 = vrot.slane %v430, 3
  %v489 = vrot.slane %v432, 3
  %v492 = vadd.f32 %v484, %v488
  %v493 = vadd.f32 %v485, %v489
  %v496 = vcombine.low %v492, %v493
  %v498 = vunpack.c.l.s4 1966171168
  %v499 = vunpack.c.0.s8 %v498
  %v500 = vlaneseq
  %v501 = vshrl.u32 %v500, 7
  %v502 = vsub.s32 %v499, %v501
  %v503 = vrot.slane %v496, %v502
  %v505 = vunpack.c.l.s4 1966171168
  %v506 = vunpack.c.0.s8 %v505
  %v507 = vlaneseq
  %v508 = vshrl.u32 %v507, 7
  %v509 = vsub.s32 %v506, %v508
  %v510 = vrot.slane %v503, %v509
  %v512 = vlaneseq
  %vm513 = vcmp.ge.s32.totalorder %v512, 0
  %vm514 = vcmp.lt.s32.totalorder %v512, 256
  %vm515 = vmand %vm513, %vm514
  %516 = vst.msk [vmem:[%s5] ss:$4 sm:$0x3] %vm515, %v510
  %v519 = vrot.slane %v331, 4
  %v520 = vrot.slane %v332, 4
  %v523 = vmul.f32 %v430, %v519
  %v524 = vmul.f32 %v432, %v520
  %v525 = vrot.slane %v333, 3
  %v526 = vrot.slane %v334, 3
  %v529 = vmul.f32 %v430, %v525
  %v530 = vmul.f32 %v432, %v526
  %v533 = vrot.slane %v529, 1
  %v534 = vrot.slane %v530, 1
  %v537 = vadd.f32 %v523, %v533
  %v538 = vadd.f32 %v524, %v534
  %v539 = vrot.slane %v335, 2
  %v540 = vrot.slane %v336, 2
  %v543 = vmul.f32 %v430, %v539
  %v544 = vmul.f32 %v432, %v540
  %v547 = vrot.slane %v543, 2
  %v548 = vrot.slane %v544, 2
  %v551 = vadd.f32 %v537, %v547
  %v552 = vadd.f32 %v538, %v548
  %v553 = vadd.f32 %v551, %v488
  %v554 = vadd.f32 %v552, %v489
  %v557 = vcombine.high %v553, %v554
  %v559 = vunpack.c.l.s4 1966171168
  %v560 = vunpack.c.0.s8 %v559
  %v561 = vlaneseq
  %v562 = vshrl.u32 %v561, 7
  %v563 = vsub.s32 %v560, %v562
  %v564 = vrot.slane %v557, %v563
  %v566 = vunpack.c.l.s4 1966171168
  %v567 = vunpack.c.0.s8 %v566
  %v568 = vlaneseq
  %v569 = vshrl.u32 %v568, 7
  %v570 = vsub.s32 %v567, %v569
  %v571 = vrot.slane %v564, %v570
  %s573 = scalar_lea.vmem %s5, 1
  %574 = vst.msk [vmem:[%s573] ss:$4 sm:$0x3] %vm515, %v571
  %v575 = vmul.f32 %v436, %v331
  %v576 = vmul.f32 %v438, %v332
  %v577 = vmul.f32 %v436, %v456
  %v578 = vmul.f32 %v438, %v457
  %v581 = vrot.slane %v577, 1
  %v582 = vrot.slane %v578, 1
  %v585 = vadd.f32 %v575, %v581
  %v586 = vadd.f32 %v576, %v582
  %v587 = vmul.f32 %v436, %v472
  %v588 = vmul.f32 %v438, %v473
  %v591 = vrot.slane %v587, 2
  %v592 = vrot.slane %v588, 2
  %v595 = vadd.f32 %v585, %v591
  %v596 = vadd.f32 %v586, %v592
  %v599 = vrot.slane %v436, 3
  %v600 = vrot.slane %v438, 3
  %v603 = vadd.f32 %v595, %v599
  %v604 = vadd.f32 %v596, %v600
  %v607 = vcombine.low %v603, %v604
  %v609 = vunpack.c.l.s4 1966171168
  %v610 = vunpack.c.0.s8 %v609
  %v611 = vlaneseq
  %v612 = vshrl.u32 %v611, 7
  %v613 = vsub.s32 %v610, %v612
  %v614 = vrot.slane %v607, %v613
  %v616 = vunpack.c.l.s4 1966171168
  %v617 = vunpack.c.0.s8 %v616
  %v618 = vlaneseq
  %v619 = vshrl.u32 %v618, 7
  %v620 = vsub.s32 %v617, %v619
  %v621 = vrot.slane %v614, %v620
  %s623 = scalar_lea.vmem %s5, 2
  %624 = vst.msk [vmem:[%s623] ss:$4 sm:$0x3] %vm515, %v621
  %v625 = vrot.slane %v331, 1
  %v626 = vrot.slane %v332, 1
  %v629 = vmul.f32 %v442, %v625
  %v630 = vmul.f32 %v444, %v626
  %v631 = vmul.f32 %v442, %v333
  %v632 = vmul.f32 %v444, %v334
  %v635 = vrot.slane %v631, 1
  %v636 = vrot.slane %v632, 1
  %v639 = vadd.f32 %v629, %v635
  %v640 = vadd.f32 %v630, %v636
  %v641 = vrot.slane %v335, 7
  %v642 = vrot.slane %v336, 7
  %v645 = vmul.f32 %v442, %v641
  %v646 = vmul.f32 %v444, %v642
  %v649 = vrot.slane %v645, 2
  %v650 = vrot.slane %v646, 2
  %v653 = vadd.f32 %v639, %v649
  %v654 = vadd.f32 %v640, %v650
  %v657 = vrot.slane %v442, 3
  %v658 = vrot.slane %v444, 3
  %v661 = vadd.f32 %v653, %v657
  %v662 = vadd.f32 %v654, %v658
  %v665 = vcombine.low %v661, %v662
  %v667 = vunpack.c.l.s4 1966171168
  %v668 = vunpack.c.0.s8 %v667
  %v669 = vlaneseq
  %v670 = vshrl.u32 %v669, 7
  %v671 = vsub.s32 %v668, %v670
  %v672 = vrot.slane %v665, %v671
  %v674 = vunpack.c.l.s4 1966171168
  %v675 = vunpack.c.0.s8 %v674
  %v676 = vlaneseq
  %v677 = vshrl.u32 %v676, 7
  %v678 = vsub.s32 %v675, %v677
  %v679 = vrot.slane %v672, %v678
  %s681 = scalar_lea.vmem %s5, 8
  %682 = vst.msk [vmem:[%s681] ss:$4 sm:$0x3] %vm515, %v679
  %v683 = vrot.slane %v331, 5
  %v684 = vrot.slane %v332, 5
  %v687 = vmul.f32 %v442, %v683
  %v688 = vmul.f32 %v444, %v684
  %v689 = vrot.slane %v333, 4
  %v690 = vrot.slane %v334, 4
  %v693 = vmul.f32 %v442, %v689
  %v694 = vmul.f32 %v444, %v690
  %v697 = vrot.slane %v693, 1
  %v698 = vrot.slane %v694, 1
  %v701 = vadd.f32 %v687, %v697
  %v702 = vadd.f32 %v688, %v698
  %v703 = vrot.slane %v335, 3
  %v704 = vrot.slane %v336, 3
  %v707 = vmul.f32 %v442, %v703
  %v708 = vmul.f32 %v444, %v704
  %v711 = vrot.slane %v707, 2
  %v712 = vrot.slane %v708, 2
  %v715 = vadd.f32 %v701, %v711
  %v716 = vadd.f32 %v702, %v712
  %v717 = vadd.f32 %v715, %v657
  %v718 = vadd.f32 %v716, %v658
  %v721 = vcombine.high %v717, %v718
  %v723 = vunpack.c.l.s4 1966171168
  %v724 = vunpack.c.0.s8 %v723
  %v725 = vlaneseq
  %v726 = vshrl.u32 %v725, 7
  %v727 = vsub.s32 %v724, %v726
  %v728 = vrot.slane %v721, %v727
  %v730 = vunpack.c.l.s4 1966171168
  %v731 = vunpack.c.0.s8 %v730
  %v732 = vlaneseq
  %v733 = vshrl.u32 %v732, 7
  %v734 = vsub.s32 %v731, %v733
  %v735 = vrot.slane %v728, %v734
  %s737 = scalar_lea.vmem %s681, 1
  %738 = vst.msk [vmem:[%s737] ss:$4 sm:$0x3] %vm515, %v735
  %v739 = vmul.f32 %v448, %v625
  %v740 = vmul.f32 %v450, %v626
  %v741 = vmul.f32 %v448, %v333
  %v742 = vmul.f32 %v450, %v334
  %v745 = vrot.slane %v741, 1
  %v746 = vrot.slane %v742, 1
  %v749 = vadd.f32 %v739, %v745
  %v750 = vadd.f32 %v740, %v746
  %v751 = vmul.f32 %v448, %v641
  %v752 = vmul.f32 %v450, %v642
  %v755 = vrot.slane %v751, 2
  %v756 = vrot.slane %v752, 2
  %v759 = vadd.f32 %v749, %v755
  %v760 = vadd.f32 %v750, %v756
  %v763 = vrot.slane %v448, 3
  %v764 = vrot.slane %v450, 3
  %v767 = vadd.f32 %v759, %v763
  %v768 = vadd.f32 %v760, %v764
  %v771 = vcombine.low %v767, %v768
  %v773 = vunpack.c.l.s4 1966171168
  %v774 = vunpack.c.0.s8 %v773
  %v775 = vlaneseq
  %v776 = vshrl.u32 %v775, 7
  %v777 = vsub.s32 %v774, %v776
  %v778 = vrot.slane %v771, %v777
  %v780 = vunpack.c.l.s4 1966171168
  %v781 = vunpack.c.0.s8 %v780
  %v782 = vlaneseq
  %v783 = vshrl.u32 %v782, 7
  %v784 = vsub.s32 %v781, %v783
  %v785 = vrot.slane %v778, %v784
  %s787 = scalar_lea.vmem %s681, 2
  %788 = vst.msk [vmem:[%s787] ss:$4 sm:$0x3] %vm515, %v785
  // Predicated region
  $region22: #{_flame_forward_impl.1} parent=0 // pred_check
    _
  $region23: #{_flame_forward_impl.1} parent=0 // pred_check_branch
    %790 = sbr.rel (0) target = $region25
  $region24: #{_flame_forward_impl.1} parent=0 // pred_region
    _
  $region25: #{_flame_forward_impl.1} parent=0 // pred_fallthru
    _
  // Predicated region
  $region26: #{_flame_forward_impl.1} parent=0 // pred_check
    _
  $region27: #{_flame_forward_impl.1} parent=0 // pred_check_branch
    %792 = sbr.rel (0) target = $region29
  $region28: #{_flame_forward_impl.1} parent=0 // pred_region
    _
  $region29: #{_flame_forward_impl.1} parent=0 // pred_fallthru
    _

</llo_original>
